<compile_context>
chip_gen: v6e
topology: v6e:2x2x1
jax: 0.10.0
libtpu: 0.0.40
codegen_flags: <defaults>
</compile_context>

<pallas_src>
import jax
import jax.numpy as jnp
from jax.experimental import pallas as pl
from jax.experimental.pallas import tpu as pltpu


def _sobel_loss_kernel(cmask_ref, pred_ref, targ_ref, out_ref, acc_ref):
    # Grid: (core_group, batch_block).  Axis 0 is "parallel", axis 1 is the
    # sequential reduction over batch blocks.
    s = pl.program_id(1)

    @pl.when(s == 0)
    def _init():
        acc_ref[...] = jnp.zeros_like(acc_ref)

    b, H, Wp = pred_ref.shape

    # Per-image left/right zero-pad masks (resident (2, 1, Wp) input).
    m_left = cmask_ref[0]     # 1.0 where column j-1 belongs to the same image
    m_right = cmask_ref[1]    # 1.0 where column j+1 belongs to the same image

    # Top/bottom zero-pad masks from a 2D iota (cheap VALU work).
    row = jax.lax.broadcasted_iota(jnp.int32, (H, Wp), 0)
    m_top = (row > 0).astype(jnp.float32)
    m_bot = (row < H - 1).astype(jnp.float32)

    def sobel_mag(x_ref):
        # Separable 3x3 Sobel (cross-correlation, zero-padded) via XLU rolls.
        x = x_ref[...].astype(jnp.float32)                  # (b, H, Wp)
        up = pltpu.roll(x, 1, axis=1) * m_top               # x[i-1, j]
        dn = pltpu.roll(x, H - 1, axis=1) * m_bot           # x[i+1, j]
        s_v = up + 2.0 * x + dn                             # vertical smoothing
        d_v = dn - up                                       # vertical difference
        gx = (pltpu.roll(s_v, Wp - 1, axis=2) * m_right     # s_v[i, j+1]
              - pltpu.roll(s_v, 1, axis=2) * m_left)        # s_v[i, j-1]
        gy = (pltpu.roll(d_v, 1, axis=2) * m_left
              + 2.0 * d_v
              + pltpu.roll(d_v, Wp - 1, axis=2) * m_right)
        return jnp.sqrt(gx * gx + gy * gy)

    diff = sobel_mag(pred_ref) - sobel_mag(targ_ref)
    bsum = jnp.sum(diff * diff, axis=0)                     # (H, Wp), VALU adds over batch

    if H % 8 == 0:
        # Fold tile-aligned 8-row groups with plain adds into the (8, Wp) accumulator.
        part = bsum[0:8, :]
        for r in range(1, H // 8):
            part = part + bsum[8 * r:8 * (r + 1), :]
        acc_ref[...] += part
    else:
        acc_ref[...] += jnp.sum(bsum, axis=0, keepdims=True)    # (1, Wp) accumulator

    @pl.when(s == pl.num_programs(1) - 1)
    def _finalize():
        # Single cross-lane reduction per core group; scalar broadcast into a
        # lane-dense (1, 8, 128) output block.
        out_ref[...] = jnp.zeros_like(out_ref) + jnp.sum(acc_ref[...])


def _num_tensorcores() -> int:
    try:
        dev = jax.devices()[0]
        for attr in ("num_cores", "core_count"):
            v = getattr(dev, attr, None)
            if v:
                return int(v)
    except Exception:
        pass
    return 1


def sobel_edge_loss(pred, target):
    """pred, target: (N, 1, H, W) -> scalar float32 (mean MSE of Sobel edge maps)."""
    N, C, H, W = pred.shape
    assert C == 1, "Sobel weights are single-channel (1,1,3,3)"
    assert target.shape == pred.shape

    # Normalize both dtypes together; keep bf16 in bf16 (halves HBM traffic).
    if pred.dtype == jnp.bfloat16 and target.dtype == jnp.bfloat16:
        in_dtype = jnp.bfloat16
    else:
        in_dtype = jnp.float32
    p = pred.reshape(N, H, W).astype(in_dtype)
    t = target.reshape(N, H, W).astype(in_dtype)

    # ---- lane packing: put K images side by side along the 128-lane axis ----
    if W < 128 and 128 % W == 0:
        K = max(1, min(128 // W, N))
    else:
        K = 1   # TODO(synk): general-W lane packing (non divisors of 128) via right-pad + mask
    if K > 1:
        n_pack = ((N + K - 1) // K) * K
        if n_pack != N:
            zp = ((0, n_pack - N), (0, 0), (0, 0))   # zero images contribute 0 to the loss
            p = jnp.pad(p, zp)
            t = jnp.pad(t, zp)
        n2 = n_pack // K
        p = p.reshape(n2, K, H, W).transpose(0, 2, 1, 3).reshape(n2, H, K * W)
        t = t.reshape(n2, K, H, W).transpose(0, 2, 1, 3).reshape(n2, H, K * W)
    else:
        n2 = N
    Wp = K * W

    # Per-image left/right boundary masks (conv2d zero padding), tiny resident input.
    col = jnp.arange(Wp, dtype=jnp.int32) % W
    cmask = jnp.stack([(col > 0).astype(jnp.float32),
                       (col < W - 1).astype(jnp.float32)]).reshape(2, 1, Wp)

    # ---- grid / tile sizing ----
    NC = 2 if (_num_tensorcores() >= 2 and n2 >= 2) else 1

    vmem_cap = 64 * 1024 * 1024
    try:
        vmem_cap = int(pltpu.get_tpu_info().vmem_capacity_bytes)
    except Exception:
        pass
    vmem_limit = min(int(vmem_cap * 3 // 4), 96 * 1024 * 1024)

    itemsize = jnp.dtype(in_dtype).itemsize
    # 2 inputs x 2 pipeline buffers at real dtype + ~6 f32 stencil temporaries.
    per_img = (2 * 2 * itemsize + 6 * 4) * H * Wp
    budget = max(per_img, vmem_limit - (2 * 1024 * 1024))
    b_tile = int(max(1, min(budget // per_img, -(-n2 // NC))))
    nb = -(-n2 // (NC * b_tile))
    n_pad = NC * b_tile * nb
    if n_pad != n2:
        zp = ((0, n_pad - n2), (0, 0), (0, 0))
        p = jnp.pad(p, zp)
        t = jnp.pad(t, zp)

    acc_rows = 8 if H % 8 == 0 else 1

    partial = pl.pallas_call(
        _sobel_loss_kernel,
        out_shape=jax.ShapeDtypeStruct((NC, 8, 128), jnp.float32),
        grid=(NC, nb),
        in_specs=[
            pl.BlockSpec((2, 1, Wp), lambda c, s: (0, 0, 0)),               # resident masks
            pl.BlockSpec((b_tile, H, Wp), lambda c, s: (c * nb + s, 0, 0)),
            pl.BlockSpec((b_tile, H, Wp), lambda c, s: (c * nb + s, 0, 0)),
        ],
        out_specs=pl.BlockSpec((1, 8, 128), lambda c, s: (c, 0, 0)),
        scratch_shapes=[pltpu.VMEM((acc_rows, Wp), jnp.float32)],
        compiler_params=pltpu.CompilerParams(
            dimension_semantics=("parallel", "arbitrary"),
            vmem_limit_bytes=vmem_limit,
        ),
    )(cmask, p, t)

    sq_sum = jnp.sum(partial[:, 0, 0])
    # F.mse_loss mean reduction over all N*C*H*W elements of the edge maps.
    return sq_sum / jnp.float32(N * C * H * W)


def _reference(pred, target):
    """Pure-JAX reference (direct 3x3 cross-correlation, like torch.conv2d)."""
    def edges(x):
        xp = jnp.pad(x[:, 0], ((0, 0), (1, 1), (1, 1)))
        H, W = x.shape[2], x.shape[3]

        def win(di, dj):
            return xp[:, di:di + H, dj:dj + W]

        gx = (-win(0, 0) + win(0, 2) - 2 * win(1, 0) + 2 * win(1, 2)
              - win(2, 0) + win(2, 2))
        gy = (-win(0, 0) - 2 * win(0, 1) - win(0, 2)
              + win(2, 0) + 2 * win(2, 1) + win(2, 2))
        return jnp.sqrt(gx * gx + gy * gy)

    d = edges(pred) - edges(target)
    return jnp.mean(d * d)


if __name__ == "__main__":
    key = jax.random.PRNGKey(0)
    k1, k2 = jax.random.split(key)
    N, C, H, W = 2, 1, 16, 16
    pred = jax.random.normal(k1, (N, C, H, W), dtype=jnp.float32)
    target = jax.random.normal(k2, (N, C, H, W), dtype=jnp.float32)

    loss = jax.block_until_ready(sobel_edge_loss(pred, target))
    ref = jax.block_until_ready(_reference(pred, target))

    assert jnp.allclose(loss, ref, rtol=1e-4, atol=1e-5), (loss, ref)
    print("KERNEL_OK")
</pallas_src>

<mosaic_0001>
module attributes {stable_mosaic.version = 11 : i64} {
  func.func @_sobel_loss_kernel(%arg0: i32, %arg1: i32, %arg2: memref<2x1x32xf32, #tpu.memory_space<vmem>>, %arg3: memref<1x16x32xf32, #tpu.memory_space<vmem>>, %arg4: memref<1x16x32xf32, #tpu.memory_space<vmem>>, %arg5: memref<1x8x128xf32, #tpu.memory_space<vmem>>, %arg6: memref<8x32xf32, #tpu.memory_space<vmem>>) attributes {dimension_semantics = [#tpu.dimension_semantics<parallel>, #tpu.dimension_semantics<arbitrary>], iteration_bounds = array<i64: 1, 1>, scalar_prefetch = 0 : i64, scratch_operands = 1 : i64, tpu.core_type = #tpu.core_type<tc>, window_params = [{pipeline_mode = #tpu.pipeline_mode<synchronous>, transform_indices = @transform_0, window_bounds = array<i64: 2, 1, 32>}, {transform_indices = @transform_1, window_bounds = array<i64: 1, 16, 32>}, {transform_indices = @transform_2, window_bounds = array<i64: 1, 16, 32>}, {transform_indices = @transform_3, window_bounds = array<i64: 1, 8, 128>}]} {
    %c0_i32 = arith.constant 0 : i32
    %0 = arith.cmpi eq, %arg1, %c0_i32 : i32
    %1 = arith.extui %0 : i1 to i32
    %c0_i32_0 = arith.constant 0 : i32
    %2 = arith.cmpi ne, %1, %c0_i32_0 : i32
    scf.if %2 {
      %cst_32 = arith.constant 0.000000e+00 : f32
      %102 = vector.broadcast %cst_32 : f32 to vector<8x32xf32>
      %c0_33 = arith.constant 0 : index
      %c0_34 = arith.constant 0 : index
      %103 = vector.load %arg6[%c0_33, %c0_34] : memref<8x32xf32, #tpu.memory_space<vmem>>, vector<8x32xf32>
      tpu.vector_store %arg6[%c0_33, %c0_34], %102 {strides = array<i32>} : memref<8x32xf32, #tpu.memory_space<vmem>>, vector<8x32xf32>,
    } else {
    }
    %c0 = arith.constant 0 : index
    %c0_1 = arith.constant 0 : index
    %c0_2 = arith.constant 0 : index
    %3 = vector.load %arg2[%c0, %c0_1, %c0_2] : memref<2x1x32xf32, #tpu.memory_space<vmem>>, vector<1x1x32xf32>
    %4 = vector.shape_cast %3 : vector<1x1x32xf32> to vector<1x32xf32>
    %c1 = arith.constant 1 : index
    %c0_3 = arith.constant 0 : index
    %c0_4 = arith.constant 0 : index
    %5 = vector.load %arg2[%c1, %c0_3, %c0_4] : memref<2x1x32xf32, #tpu.memory_space<vmem>>, vector<1x1x32xf32>
    %6 = vector.shape_cast %5 : vector<1x1x32xf32> to vector<1x32xf32>
    %7 = tpu.iota {dimensions = array<i32: 0>} : vector<16x32xi32>
    %c0_i32_5 = arith.constant 0 : i32
    %8 = vector.broadcast %c0_i32_5 : i32 to vector<16x32xi32>
    %9 = arith.cmpi sgt, %7, %8 : vector<16x32xi32>
    %10 = arith.extui %9 : vector<16x32xi1> to vector<16x32xi32>
    %11 = arith.sitofp %10 : vector<16x32xi32> to vector<16x32xf32>
    %c15_i32 = arith.constant 15 : i32
    %12 = vector.broadcast %c15_i32 : i32 to vector<16x32xi32>
    %13 = arith.cmpi slt, %7, %12 : vector<16x32xi32>
    %14 = arith.extui %13 : vector<16x32xi1> to vector<16x32xi32>
    %15 = arith.sitofp %14 : vector<16x32xi32> to vector<16x32xf32>
    %c0_6 = arith.constant 0 : index
    %c0_7 = arith.constant 0 : index
    %c0_8 = arith.constant 0 : index
    %16 = vector.load %arg3[%c0_6, %c0_7, %c0_8] : memref<1x16x32xf32, #tpu.memory_space<vmem>>, vector<1x16x32xf32>
    %c1_i32 = arith.constant 1 : i32
    %17 = tpu.dynamic_rotate %16 by %c1_i32 dim 1 : vector<1x16x32xf32>, i32 -> vector<1x16x32xf32>
    %18 = vector.shape_cast %11 : vector<16x32xf32> to vector<1x16x32xf32>
    %19 = arith.mulf %17, %18 : vector<1x16x32xf32>
    %c15_i32_9 = arith.constant 15 : i32
    %20 = tpu.dynamic_rotate %16 by %c15_i32_9 dim 1 : vector<1x16x32xf32>, i32 -> vector<1x16x32xf32>
    %21 = vector.shape_cast %15 : vector<16x32xf32> to vector<1x16x32xf32>
    %22 = arith.mulf %20, %21 : vector<1x16x32xf32>
    %cst = arith.constant 2.000000e+00 : f32
    %23 = vector.broadcast %cst : f32 to vector<1x16x32xf32>
    %24 = arith.mulf %23, %16 : vector<1x16x32xf32>
    %25 = arith.addf %19, %24 : vector<1x16x32xf32>
    %26 = arith.addf %25, %22 : vector<1x16x32xf32>
    %27 = arith.subf %22, %19 : vector<1x16x32xf32>
    %c31_i32 = arith.constant 31 : i32
    %28 = tpu.dynamic_rotate %26 by %c31_i32 dim 2 : vector<1x16x32xf32>, i32 -> vector<1x16x32xf32>
    %29 = vector.shape_cast %6 : vector<1x32xf32> to vector<1x1x32xf32>
    %30 = vector.broadcast %29 : vector<1x1x32xf32> to vector<1x16x32xf32>
    %31 = arith.mulf %28, %30 : vector<1x16x32xf32>
    %c1_i32_10 = arith.constant 1 : i32
    %32 = tpu.dynamic_rotate %26 by %c1_i32_10 dim 2 : vector<1x16x32xf32>, i32 -> vector<1x16x32xf32>
    %33 = vector.shape_cast %4 : vector<1x32xf32> to vector<1x1x32xf32>
    %34 = vector.broadcast %33 : vector<1x1x32xf32> to vector<1x16x32xf32>
    %35 = arith.mulf %32, %34 : vector<1x16x32xf32>
    %36 = arith.subf %31, %35 : vector<1x16x32xf32>
    %c1_i32_11 = arith.constant 1 : i32
    %37 = tpu.dynamic_rotate %27 by %c1_i32_11 dim 2 : vector<1x16x32xf32>, i32 -> vector<1x16x32xf32>
    %38 = vector.shape_cast %4 : vector<1x32xf32> to vector<1x1x32xf32>
    %39 = vector.broadcast %38 : vector<1x1x32xf32> to vector<1x16x32xf32>
    %40 = arith.mulf %37, %39 : vector<1x16x32xf32>
    %cst_12 = arith.constant 2.000000e+00 : f32
    %41 = vector.broadcast %cst_12 : f32 to vector<1x16x32xf32>
    %42 = arith.mulf %41, %27 : vector<1x16x32xf32>
    %43 = arith.addf %40, %42 : vector<1x16x32xf32>
    %c31_i32_13 = arith.constant 31 : i32
    %44 = tpu.dynamic_rotate %27 by %c31_i32_13 dim 2 : vector<1x16x32xf32>, i32 -> vector<1x16x32xf32>
    %45 = vector.shape_cast %6 : vector<1x32xf32> to vector<1x1x32xf32>
    %46 = vector.broadcast %45 : vector<1x1x32xf32> to vector<1x16x32xf32>
    %47 = arith.mulf %44, %46 : vector<1x16x32xf32>
    %48 = arith.addf %43, %47 : vector<1x16x32xf32>
    %49 = arith.mulf %36, %36 : vector<1x16x32xf32>
    %50 = arith.mulf %48, %48 : vector<1x16x32xf32>
    %51 = arith.addf %49, %50 : vector<1x16x32xf32>
    %52 = math.sqrt %51 : vector<1x16x32xf32>
    %c0_14 = arith.constant 0 : index
    %c0_15 = arith.constant 0 : index
    %c0_16 = arith.constant 0 : index
    %53 = vector.load %arg4[%c0_14, %c0_15, %c0_16] : memref<1x16x32xf32, #tpu.memory_space<vmem>>, vector<1x16x32xf32>
    %c1_i32_17 = arith.constant 1 : i32
    %54 = tpu.dynamic_rotate %53 by %c1_i32_17 dim 1 : vector<1x16x32xf32>, i32 -> vector<1x16x32xf32>
    %55 = vector.shape_cast %11 : vector<16x32xf32> to vector<1x16x32xf32>
    %56 = arith.mulf %54, %55 : vector<1x16x32xf32>
    %c15_i32_18 = arith.constant 15 : i32
    %57 = tpu.dynamic_rotate %53 by %c15_i32_18 dim 1 : vector<1x16x32xf32>, i32 -> vector<1x16x32xf32>
    %58 = vector.shape_cast %15 : vector<16x32xf32> to vector<1x16x32xf32>
    %59 = arith.mulf %57, %58 : vector<1x16x32xf32>
    %cst_19 = arith.constant 2.000000e+00 : f32
    %60 = vector.broadcast %cst_19 : f32 to vector<1x16x32xf32>
    %61 = arith.mulf %60, %53 : vector<1x16x32xf32>
    %62 = arith.addf %56, %61 : vector<1x16x32xf32>
    %63 = arith.addf %62, %59 : vector<1x16x32xf32>
    %64 = arith.subf %59, %56 : vector<1x16x32xf32>
    %c31_i32_20 = arith.constant 31 : i32
    %65 = tpu.dynamic_rotate %63 by %c31_i32_20 dim 2 : vector<1x16x32xf32>, i32 -> vector<1x16x32xf32>
    %66 = vector.shape_cast %6 : vector<1x32xf32> to vector<1x1x32xf32>
    %67 = vector.broadcast %66 : vector<1x1x32xf32> to vector<1x16x32xf32>
    %68 = arith.mulf %65, %67 : vector<1x16x32xf32>
    %c1_i32_21 = arith.constant 1 : i32
    %69 = tpu.dynamic_rotate %63 by %c1_i32_21 dim 2 : vector<1x16x32xf32>, i32 -> vector<1x16x32xf32>
    %70 = vector.shape_cast %4 : vector<1x32xf32> to vector<1x1x32xf32>
    %71 = vector.broadcast %70 : vector<1x1x32xf32> to vector<1x16x32xf32>
    %72 = arith.mulf %69, %71 : vector<1x16x32xf32>
    %73 = arith.subf %68, %72 : vector<1x16x32xf32>
    %c1_i32_22 = arith.constant 1 : i32
    %74 = tpu.dynamic_rotate %64 by %c1_i32_22 dim 2 : vector<1x16x32xf32>, i32 -> vector<1x16x32xf32>
    %75 = vector.shape_cast %4 : vector<1x32xf32> to vector<1x1x32xf32>
    %76 = vector.broadcast %75 : vector<1x1x32xf32> to vector<1x16x32xf32>
    %77 = arith.mulf %74, %76 : vector<1x16x32xf32>
    %cst_23 = arith.constant 2.000000e+00 : f32
    %78 = vector.broadcast %cst_23 : f32 to vector<1x16x32xf32>
    %79 = arith.mulf %78, %64 : vector<1x16x32xf32>
    %80 = arith.addf %77, %79 : vector<1x16x32xf32>
    %c31_i32_24 = arith.constant 31 : i32
    %81 = tpu.dynamic_rotate %64 by %c31_i32_24 dim 2 : vector<1x16x32xf32>, i32 -> vector<1x16x32xf32>
    %82 = vector.shape_cast %6 : vector<1x32xf32> to vector<1x1x32xf32>
    %83 = vector.broadcast %82 : vector<1x1x32xf32> to vector<1x16x32xf32>
    %84 = arith.mulf %81, %83 : vector<1x16x32xf32>
    %85 = arith.addf %80, %84 : vector<1x16x32xf32>
    %86 = arith.mulf %73, %73 : vector<1x16x32xf32>
    %87 = arith.mulf %85, %85 : vector<1x16x32xf32>
    %88 = arith.addf %86, %87 : vector<1x16x32xf32>
    %89 = math.sqrt %88 : vector<1x16x32xf32>
    %90 = arith.subf %52, %89 : vector<1x16x32xf32>
    %91 = arith.mulf %90, %90 : vector<1x16x32xf32>
    %cst_25 = arith.constant dense<0.000000e+00> : vector<16x32xf32>
    %92 = vector.multi_reduction <add>, %91, %cst_25 [0] : vector<1x16x32xf32> to vector<16x32xf32>
    %93 = vector.extract_strided_slice %92 {offsets = [0, 0], sizes = [8, 32], strides = [1, 1]} : vector<16x32xf32> to vector<8x32xf32>
    %94 = vector.extract_strided_slice %92 {offsets = [8, 0], sizes = [8, 32], strides = [1, 1]} : vector<16x32xf32> to vector<8x32xf32>
    %95 = arith.addf %93, %94 : vector<8x32xf32>
    %c0_26 = arith.constant 0 : index
    %c0_27 = arith.constant 0 : index
    %96 = vector.load %arg6[%c0_26, %c0_27] : memref<8x32xf32, #tpu.memory_space<vmem>>, vector<8x32xf32>
    %97 = arith.addf %96, %95 : vector<8x32xf32>
    %c0_28 = arith.constant 0 : index
    %c0_29 = arith.constant 0 : index
    %98 = vector.load %arg6[%c0_28, %c0_29] : memref<8x32xf32, #tpu.memory_space<vmem>>, vector<8x32xf32>
    tpu.vector_store %arg6[%c0_28, %c0_29], %97 {strides = array<i32>} : memref<8x32xf32, #tpu.memory_space<vmem>>, vector<8x32xf32>,
    %c0_i32_30 = arith.constant 0 : i32
    %99 = arith.cmpi eq, %arg1, %c0_i32_30 : i32
    %100 = arith.extui %99 : i1 to i32
    %c0_i32_31 = arith.constant 0 : i32
    %101 = arith.cmpi ne, %100, %c0_i32_31 : i32
    scf.if %101 {
      %cst_32 = arith.constant 0.000000e+00 : f32
      %102 = vector.broadcast %cst_32 : f32 to vector<1x8x128xf32>
      %c0_33 = arith.constant 0 : index
      %c0_34 = arith.constant 0 : index
      %103 = vector.load %arg6[%c0_33, %c0_34] : memref<8x32xf32, #tpu.memory_space<vmem>>, vector<8x32xf32>
      %104 = vector.shape_cast %103 : vector<8x32xf32> to vector<1x8x32xf32>
      %cst_35 = arith.constant dense<0.000000e+00> : vector<1xf32>
      %105 = vector.multi_reduction <add>, %104, %cst_35 [1, 2] : vector<1x8x32xf32> to vector<1xf32>
      %106 = vector.shape_cast %105 : vector<1xf32> to vector<1x1x1xf32>
      %107 = vector.extract %106[0, 0, 0] : f32 from vector<1x1x1xf32>
      %108 = vector.broadcast %107 : f32 to vector<1x8x128xf32>
      %109 = arith.addf %102, %108 : vector<1x8x128xf32>
      %c0_36 = arith.constant 0 : index
      %c0_37 = arith.constant 0 : index
      %c0_38 = arith.constant 0 : index
      %110 = vector.load %arg5[%c0_36, %c0_37, %c0_38] : memref<1x8x128xf32, #tpu.memory_space<vmem>>, vector<1x8x128xf32>
      tpu.vector_store %arg5[%c0_36, %c0_37, %c0_38], %109 {strides = array<i32>} : memref<1x8x128xf32, #tpu.memory_space<vmem>>, vector<1x8x128xf32>,
    } else {
    }
    return
  }
  func.func @transform_0(%arg0: i32, %arg1: i32) -> (i32, i32, i32) {
    %c0_i32 = arith.constant 0 : i32
    %c0_i32_0 = arith.constant 0 : i32
    %c0_i32_1 = arith.constant 0 : i32
    %c0_i32_2 = arith.constant 0 : i32
    return %c0_i32, %c0_i32_0, %c0_i32_1 : i32, i32, i32
  }
  func.func @transform_1(%arg0: i32, %arg1: i32) -> (i32, i32, i32) {
    %c1_i32 = arith.constant 1 : i32
    %0 = arith.muli %arg0, %c1_i32 : i32
    %1 = arith.addi %0, %arg1 : i32
    %c0_i32 = arith.constant 0 : i32
    %c0_i32_0 = arith.constant 0 : i32
    %c0_i32_1 = arith.constant 0 : i32
    return %1, %c0_i32, %c0_i32_0 : i32, i32, i32
  }
  func.func @transform_2(%arg0: i32, %arg1: i32) -> (i32, i32, i32) {
    %c1_i32 = arith.constant 1 : i32
    %0 = arith.muli %arg0, %c1_i32 : i32
    %1 = arith.addi %0, %arg1 : i32
    %c0_i32 = arith.constant 0 : i32
    %c0_i32_0 = arith.constant 0 : i32
    %c0_i32_1 = arith.constant 0 : i32
    return %1, %c0_i32, %c0_i32_0 : i32, i32, i32
  }
  func.func @transform_3(%arg0: i32, %arg1: i32) -> (i32, i32, i32) {
    %c0_i32 = arith.constant 0 : i32
    %c0_i32_0 = arith.constant 0 : i32
    %c0_i32_1 = arith.constant 0 : i32
    return %arg0, %c0_i32, %c0_i32_0 : i32, i32, i32
  }
}

</mosaic_0001>

<llo_original>
// kernel: tpu_custom_call.1
$region0: #{tpu_custom_call.1}
  #allocation0 [shape = 'u32[]', space=smem, size = 0x4, offset = 0x4, fixed_abs, tag = 'smem constant byte address 0x4 - core index']
  #allocation1 [shape = 'u32[144,128]{1,0:T(1,128)}', space=vmem, size = 0x12000, scoped, tag = 'internal scratch']
  #allocation2 [shape = 'f32[8,32]{1,0:T(8,128)}', space=vmem, size = 0x1000, scoped, tag = 'scratch operand']
  %s0 = inlined_call_operand.hbm [shape: f32[2,1,32], index: 0, kind: input, shape index: {}]
  %s1 = inlined_call_operand.hbm [shape: f32[1,16,32], index: 1, kind: input, shape index: {}]
  %s2 = inlined_call_operand.hbm [shape: f32[1,16,32], index: 2, kind: input, shape index: {}]
  %s3 = inlined_call_operand.hbm [shape: f32[1,8,128], index: 3, kind: output, shape index: {}]
  %s4 = sld [smem:[#allocation0]]
  $region42: #{tpu_custom_call.1} parent=0
    _
  %s6 = ssub.s32 1, %s4
  %s7 = scalar_select 0, %s6, %s4
  $region1: #{tpu_custom_call.1} parent=0
    #allocation3 [shape = 'u8[1024]{0}', space=vmem, size = 0x400, scoped, tag = 'input window, operand 0, single buffered']
    #allocation4 [shape = 's32[1]{0}', space=sflag, size = 0x4, scoped, tag = 'scoped memory for tpu_custom_call.1']
    #allocation5 [shape = 's32[1]{0}', space=sflag, size = 0x4, scoped, tag = 'scoped memory for tpu_custom_call.1']
    #allocation6 [shape = 'u8[8192]{0}', space=vmem, size = 0x2000, scoped, tag = 'input window, operand 1, single buffered']
    #allocation7 [shape = 's32[1]{0}', space=sflag, size = 0x4, scoped, tag = 'scoped memory for tpu_custom_call.1']
    #allocation8 [shape = 'u8[8192]{0}', space=vmem, size = 0x2000, scoped, tag = 'input window, operand 2, single buffered']
    #allocation9 [shape = 'u8[4096]{0}', space=vmem, size = 0x1000, scoped, tag = 'output window, operand 0, single buffered']
    %8 = vsyncpa [#allocation4], 0
    %9 = vsyncpa [#allocation7], 0
    %10 = vsyncpa [#allocation5], 0
    // Predicated region
    $region2: #{tpu_custom_call.1} parent=1 // pred_check
      _
    $region3: #{tpu_custom_call.1} parent=1 // pred_check_branch
      %12 = sbr.rel (0) target = $region5
    $region4: #{tpu_custom_call.1} parent=1 // pred_region
      %s14 = ssub.s32 32, 32
      %15 = vsyncadd [#allocation4], %s14
      %s16 = sshll.u32 [#allocation3], 4
      %s17 = int_to_ptr.vmem [resolvable:$true] %s16
      %22 = dma.hbm_to_vmem [thread:$0]  %s0, 32, %s17, [#allocation4], 16, 16, 1
    $region5: #{tpu_custom_call.1} parent=1 // pred_fallthru
      _
    // Predicated region
    $region6: #{tpu_custom_call.1} parent=1 // pred_check
      _
    $region7: #{tpu_custom_call.1} parent=1 // pred_check_branch
      %24 = sbr.rel (0) target = $region9
    $region8: #{tpu_custom_call.1} parent=1 // pred_region
      %s25 = sadd.s32 0, 0
      %s27 = ssub.s32 256, 256
      %28 = vsyncadd [#allocation7], %s27
      %s29 = smul.addr %s25, 2
      %s30 = smul.addr %s29, 128
      %s31 = scalar_lea.hbm %s1, %s30
      %s32 = sshll.u32 [#allocation6], 4
      %s33 = int_to_ptr.vmem [resolvable:$true] %s32
      %38 = dma.hbm_to_vmem [thread:$0]  %s31, 256, %s33, [#allocation7], 128, 128, 8
    $region9: #{tpu_custom_call.1} parent=1 // pred_fallthru
      _
    // Predicated region
    $region10: #{tpu_custom_call.1} parent=1 // pred_check
      _
    $region11: #{tpu_custom_call.1} parent=1 // pred_check_branch
      %40 = sbr.rel (0) target = $region13
    $region12: #{tpu_custom_call.1} parent=1 // pred_region
      %s41 = sadd.s32 0, 0
      %s43 = ssub.s32 256, 256
      %44 = vsyncadd [#allocation7], %s43
      %s45 = smul.addr %s41, 2
      %s46 = smul.addr %s45, 128
      %s47 = scalar_lea.hbm %s2, %s46
      %s48 = sshll.u32 [#allocation8], 4
      %s49 = int_to_ptr.vmem [resolvable:$true] %s48
      %54 = dma.hbm_to_vmem [thread:$0]  %s47, 256, %s49, [#allocation7], 128, 128, 8
    $region13: #{tpu_custom_call.1} parent=1 // pred_fallthru
      _
    // Predicated region
    $region14: #{tpu_custom_call.1} parent=1 // pred_check
      _
    $region15: #{tpu_custom_call.1} parent=1 // pred_check_branch
      %56 = sbr.rel (0) target = $region17
    $region16: #{tpu_custom_call.1} parent=1 // pred_region
      %57 = dma.done [#allocation4], 32
    $region17: #{tpu_custom_call.1} parent=1 // pred_fallthru
      _
    // Predicated region
    $region18: #{tpu_custom_call.1} parent=1 // pred_check
      _
    $region19: #{tpu_custom_call.1} parent=1 // pred_check_branch
      %59 = sbr.rel (0) target = $region21
    $region20: #{tpu_custom_call.1} parent=1 // pred_region
      %60 = dma.done [#allocation7], 256
    $region21: #{tpu_custom_call.1} parent=1 // pred_fallthru
      _
    // Predicated region
    $region22: #{tpu_custom_call.1} parent=1 // pred_check
      _
    $region23: #{tpu_custom_call.1} parent=1 // pred_check_branch
      %62 = sbr.rel (0) target = $region25
    $region24: #{tpu_custom_call.1} parent=1 // pred_region
      %63 = dma.done [#allocation7], 256
    $region25: #{tpu_custom_call.1} parent=1 // pred_fallthru
      _
    %s64 = sadd.s32 0, 0
    %s65 = sadd.s32 0, 0
    %p66 = scmp.eq.s32.totalorder 0, 0
    // Predicated region
    $region26: #{tpu_custom_call.1} parent=1 // pred_check
      %p67 = pneg %p66
    $region27: #{tpu_custom_call.1} parent=1 // pred_check_branch
      %69 = sbr.rel (%p67) target = $region29
    $region28: #{tpu_custom_call.1} parent=1 // pred_region
      %vm70 = vcmask 261120
      %71 = vst.msk [vmem:[#allocation2] sm:$0xff] %vm70, 0.0
    $region29: #{tpu_custom_call.1} parent=1 // pred_fallthru
      _
    %v72 = vld [vmem:[#allocation3] sm:$0x1]
    %s73 = scalar_lea.vmem [#allocation3], 1
    %v74 = vld [vmem:[%s73] sm:$0x1]
    %v75 = vlaneseq
    %v76 = vshrl.u32 %v75, 7
    %v77 = vadd.s32 %v76, 8
    %vm78 = vcmp.gt.s32.totalorder %v76, 0
    %vm79 = vcmp.gt.s32.totalorder %v77, 0
    %v80 = vsel %vm78, 1, 0
    %v81 = vsel %vm79, 1, 0
    %v82 = vcvt.s32.f32 %v80
    %v83 = vcvt.s32.f32 %v81
    %vm84 = vcmp.lt.s32.totalorder %v76, 15
    %vm85 = vcmp.lt.s32.totalorder %v77, 15
    %v86 = vsel %vm84, 1, 0
    %v87 = vsel %vm85, 1, 0
    %v88 = vcvt.s32.f32 %v86
    %v89 = vcvt.s32.f32 %v87
    %v90 = vld [vmem:[#allocation6] sm:$0xff]
    %v91 = vld [vmem:[#allocation6 + $0x8] sm:$0xff]
    %v92 = vrot.slane %v90, 7
    %v93 = vrot.slane %v91, 7
    %vm94 = vcmp.lt.s32.totalorder %v76, 1
    %v95 = vsel %vm94, %v92, %v93
    %v96 = vsel %vm94, %v93, %v92
    %v97 = vmul.f32 %v96, %v82
    %v98 = vmul.f32 %v95, %v83
    %v99 = vrot.slane %v90, 1
    %v100 = vrot.slane %v91, 1
    %vm101 = vcmp.lt.s32.totalorder %v76, 7
    %v102 = vsel %vm101, %v99, %v100
    %v103 = vsel %vm101, %v100, %v99
    %v104 = vmul.f32 %v102, %v88
    %v105 = vmul.f32 %v103, %v89
    %v106 = vmul.f32 %v90, 2.0
    %v107 = vmul.f32 %v91, 2.0
    %v108 = vadd.f32 %v97, %v106
    %v109 = vadd.f32 %v98, %v107
    %v110 = vadd.f32 %v108, %v104
    %v111 = vadd.f32 %v109, %v105
    %v112 = vsub.f32 %v104, %v97
    %v113 = vsub.f32 %v105, %v98
    %vm114 = vcmask 1047808
    %115 = vrot.lane.b32.xlu0 %v110, 32
    %v116 = vpop.permute.xlu0 %115
    %v117 = vsel %vm114, %v116, %v110
    %118 = vrot.lane.b32.xlu0 %v111, 32
    %v119 = vpop.permute.xlu0 %118
    %v120 = vsel %vm114, %v119, %v111
    %121 = vrot.lane.b32.xlu0 %v117, 32
    %v122 = vpop.permute.xlu0 %121
    %123 = vrot.lane.b32.xlu0 %v120, 32
    %v124 = vpop.permute.xlu0 %123
    %v125 = vsel %vm114, %v122, %v110
    %v126 = vsel %vm114, %v124, %v111
    %v128 = vlaneseq
    %v129 = vshrl.u32 %v128, 7
    %v130 = vsub.s32 0, %v129
    %v131 = vrot.slane %v74, %v130
    %132 = vrot.lane.b32.xlu0 %v131, 1
    %v133 = vpop.permute.xlu0 %132
    %v135 = vmul.f32 %v125, %v133
    %v136 = vmul.f32 %v126, %v133
    %v138 = vlaneseq
    %v139 = vshrl.u32 %v138, 7
    %v140 = vsub.s32 0, %v139
    %v141 = vrot.slane %v72, %v140
    %142 = vrot.lane.b32.xlu0 %v141, 31
    %v143 = vpop.permute.xlu0 %142
    %v145 = vmul.f32 %v125, %v143
    %v146 = vmul.f32 %v126, %v143
    %149 = vrot.lane.b32.xlu0 %v145, 98
    %v150 = vpop.permute.xlu0 %149
    %151 = vrot.lane.b32.xlu0 %v146, 98
    %v152 = vpop.permute.xlu0 %151
    %v155 = vsub.f32 %v135, %v150
    %v156 = vsub.f32 %v136, %v152
    %157 = vrot.lane.b32.xlu0 %v112, 32
    %v158 = vpop.permute.xlu0 %157
    %v159 = vsel %vm114, %v158, %v112
    %160 = vrot.lane.b32.xlu0 %v113, 32
    %v161 = vpop.permute.xlu0 %160
    %v162 = vsel %vm114, %v161, %v113
    %163 = vrot.lane.b32.xlu0 %v159, 32
    %v164 = vpop.permute.xlu0 %163
    %165 = vrot.lane.b32.xlu0 %v162, 32
    %v166 = vpop.permute.xlu0 %165
    %v167 = vsel %vm114, %v164, %v112
    %v168 = vsel %vm114, %v166, %v113
    %v169 = vmul.f32 %v167, %v143
    %v170 = vmul.f32 %v168, %v143
    %v171 = vmul.f32 %v112, 2.0
    %v172 = vmul.f32 %v113, 2.0
    %175 = vrot.lane.b32.xlu0 %v171, 31
    %v176 = vpop.permute.xlu0 %175
    %177 = vrot.lane.b32.xlu0 %v172, 31
    %v178 = vpop.permute.xlu0 %177
    %v181 = vadd.f32 %v169, %v176
    %v182 = vadd.f32 %v170, %v178
    %v183 = vmul.f32 %v167, %v133
    %v184 = vmul.f32 %v168, %v133
    %187 = vrot.lane.b32.xlu0 %v183, 30
    %v188 = vpop.permute.xlu0 %187
    %189 = vrot.lane.b32.xlu0 %v184, 30
    %v190 = vpop.permute.xlu0 %189
    %v193 = vadd.f32 %v181, %v188
    %v194 = vadd.f32 %v182, %v190
    %v195 = vmul.f32 %v155, %v155
    %v196 = vmul.f32 %v156, %v156
    %v197 = vmul.f32 %v193, %v193
    %v198 = vmul.f32 %v194, %v194
    %201 = vrot.lane.b32.xlu0 %v197, 98
    %v202 = vpop.permute.xlu0 %201
    %203 = vrot.lane.b32.xlu0 %v198, 98
    %v204 = vpop.permute.xlu0 %203
    %v207 = vadd.f32 %v195, %v202
    %v208 = vadd.f32 %v196, %v204
    %v209 = vrsqrt.pop %v207
    %v210 = vmul.f32 %v207, %v209
    %vm211 = vcmp.eq.f32.partialorder %v207, inf
    %v212 = vsel %vm211, %v207, %v210
    %vm213 = vcmp.eq.f32.partialorder %v207, 0.0
    %v214 = vand.u32 %v207, 2147483648
    %v215 = vsel %vm213, %v214, %v212
    %v216 = vrsqrt.pop %v208
    %v217 = vmul.f32 %v208, %v216
    %vm218 = vcmp.eq.f32.partialorder %v208, inf
    %v219 = vsel %vm218, %v208, %v217
    %vm220 = vcmp.eq.f32.partialorder %v208, 0.0
    %v221 = vand.u32 %v208, 2147483648
    %v222 = vsel %vm220, %v221, %v219
    %v223 = vld [vmem:[#allocation8] sm:$0xff]
    %v224 = vld [vmem:[#allocation8 + $0x8] sm:$0xff]
    %v225 = vrot.slane %v223, 7
    %v226 = vrot.slane %v224, 7
    %v227 = vsel %vm94, %v225, %v226
    %v228 = vsel %vm94, %v226, %v225
    %v229 = vmul.f32 %v228, %v82
    %v230 = vmul.f32 %v227, %v83
    %v231 = vrot.slane %v223, 1
    %v232 = vrot.slane %v224, 1
    %v233 = vsel %vm101, %v231, %v232
    %v234 = vsel %vm101, %v232, %v231
    %v235 = vmul.f32 %v233, %v88
    %v236 = vmul.f32 %v234, %v89
    %v237 = vmul.f32 %v223, 2.0
    %v238 = vmul.f32 %v224, 2.0
    %v239 = vadd.f32 %v229, %v237
    %v240 = vadd.f32 %v230, %v238
    %v241 = vadd.f32 %v239, %v235
    %v242 = vadd.f32 %v240, %v236
    %v243 = vsub.f32 %v235, %v229
    %v244 = vsub.f32 %v236, %v230
    %245 = vrot.lane.b32.xlu0 %v241, 32
    %v246 = vpop.permute.xlu0 %245
    %v247 = vsel %vm114, %v246, %v241
    %248 = vrot.lane.b32.xlu0 %v242, 32
    %v249 = vpop.permute.xlu0 %248
    %v250 = vsel %vm114, %v249, %v242
    %251 = vrot.lane.b32.xlu0 %v247, 32
    %v252 = vpop.permute.xlu0 %251
    %253 = vrot.lane.b32.xlu0 %v250, 32
    %v254 = vpop.permute.xlu0 %253
    %v255 = vsel %vm114, %v252, %v241
    %v256 = vsel %vm114, %v254, %v242
    %v257 = vmul.f32 %v255, %v133
    %v258 = vmul.f32 %v256, %v133
    %v259 = vmul.f32 %v255, %v143
    %v260 = vmul.f32 %v256, %v143
    %263 = vrot.lane.b32.xlu0 %v259, 98
    %v264 = vpop.permute.xlu0 %263
    %265 = vrot.lane.b32.xlu0 %v260, 98
    %v266 = vpop.permute.xlu0 %265
    %v269 = vsub.f32 %v257, %v264
    %v270 = vsub.f32 %v258, %v266
    %271 = vrot.lane.b32.xlu0 %v243, 32
    %v272 = vpop.permute.xlu0 %271
    %v273 = vsel %vm114, %v272, %v243
    %274 = vrot.lane.b32.xlu0 %v244, 32
    %v275 = vpop.permute.xlu0 %274
    %v276 = vsel %vm114, %v275, %v244
    %277 = vrot.lane.b32.xlu0 %v273, 32
    %v278 = vpop.permute.xlu0 %277
    %279 = vrot.lane.b32.xlu0 %v276, 32
    %v280 = vpop.permute.xlu0 %279
    %v281 = vsel %vm114, %v278, %v243
    %v282 = vsel %vm114, %v280, %v244
    %v283 = vmul.f32 %v281, %v143
    %v284 = vmul.f32 %v282, %v143
    %v285 = vmul.f32 %v243, 2.0
    %v286 = vmul.f32 %v244, 2.0
    %289 = vrot.lane.b32.xlu0 %v285, 31
    %v290 = vpop.permute.xlu0 %289
    %291 = vrot.lane.b32.xlu0 %v286, 31
    %v292 = vpop.permute.xlu0 %291
    %v295 = vadd.f32 %v283, %v290
    %v296 = vadd.f32 %v284, %v292
    %v297 = vmul.f32 %v281, %v133
    %v298 = vmul.f32 %v282, %v133
    %301 = vrot.lane.b32.xlu0 %v297, 30
    %v302 = vpop.permute.xlu0 %301
    %303 = vrot.lane.b32.xlu0 %v298, 30
    %v304 = vpop.permute.xlu0 %303
    %v307 = vadd.f32 %v295, %v302
    %v308 = vadd.f32 %v296, %v304
    %v309 = vmul.f32 %v269, %v269
    %v310 = vmul.f32 %v270, %v270
    %v311 = vmul.f32 %v307, %v307
    %v312 = vmul.f32 %v308, %v308
    %315 = vrot.lane.b32.xlu0 %v311, 98
    %v316 = vpop.permute.xlu0 %315
    %317 = vrot.lane.b32.xlu0 %v312, 98
    %v318 = vpop.permute.xlu0 %317
    %v321 = vadd.f32 %v309, %v316
    %v322 = vadd.f32 %v310, %v318
    %v323 = vrsqrt.pop %v321
    %v324 = vmul.f32 %v321, %v323
    %vm325 = vcmp.eq.f32.partialorder %v321, inf
    %v326 = vsel %vm325, %v321, %v324
    %vm327 = vcmp.eq.f32.partialorder %v321, 0.0
    %v328 = vand.u32 %v321, 2147483648
    %v329 = vsel %vm327, %v328, %v326
    %v330 = vrsqrt.pop %v322
    %v331 = vmul.f32 %v322, %v330
    %vm332 = vcmp.eq.f32.partialorder %v322, inf
    %v333 = vsel %vm332, %v322, %v331
    %vm334 = vcmp.eq.f32.partialorder %v322, 0.0
    %v335 = vand.u32 %v322, 2147483648
    %v336 = vsel %vm334, %v335, %v333
    %v337 = vsub.f32 %v215, %v329
    %v338 = vsub.f32 %v222, %v336
    %v339 = vmul.f32 %v337, %v337
    %v340 = vmul.f32 %v338, %v338
    %v341 = vadd.f32 %v339, 0.0
    %v342 = vadd.f32 %v340, 0.0
    %v343 = vadd.f32 %v341, %v342
    %v344 = vld [vmem:[#allocation2] sm:$0xff]
    %346 = vrot.lane.b32.xlu0 %v343, 127
    %v347 = vpop.permute.xlu0 %346
    %v349 = vadd.f32 %v344, %v347
    %vm350 = vcmask 261120
    %351 = vst.msk [vmem:[#allocation2] sm:$0xff] %vm350, %v349
    // Predicated region
    $region30: #{tpu_custom_call.1} parent=1 // pred_check
      %p352 = pneg %p66
    $region31: #{tpu_custom_call.1} parent=1 // pred_check_branch
      %354 = sbr.rel (%p352) target = $region33
    $region32: #{tpu_custom_call.1} parent=1 // pred_region
      %v355 = vld [vmem:[#allocation2] sm:$0xff]
      %v356 = vsel %vm350, %v355, 0.0
      %357 = vadd.xlane.f32.xlu0 %v356
      %v358 = vpop.xlane.xlu0 %357
      %v359 = vrot.slane %v358, 4
      %v360 = vadd.f32 %v358, %v359
      %v361 = vrot.slane %v360, 2
      %v362 = vadd.f32 %v360, %v361
      %v363 = vrot.slane %v362, 1
      %v364 = vadd.f32 %v362, %v363
      %s365 = vtos %v364
      %v366 = vstv %s365
      %v367 = vadd.f32 %v366, 0.0
      %368 = vst [vmem:[#allocation9] sm:$0xff] %v367
    $region33: #{tpu_custom_call.1} parent=1 // pred_fallthru
      _
    // Predicated region
    $region34: #{tpu_custom_call.1} parent=1 // pred_check
      _
    $region35: #{tpu_custom_call.1} parent=1 // pred_check_branch
      %370 = sbr.rel (0) target = $region37
    $region36: #{tpu_custom_call.1} parent=1 // pred_region
      %s372 = ssub.s32 128, 128
      %373 = vsyncadd [#allocation5], %s372
      %s375 = sshll.u32 [#allocation9], 4
      %s376 = int_to_ptr.vmem [resolvable:$true] %s375
      %378 = dma.vmem_to_hbm [thread:$0]  %s376, 128, %s3, [#allocation5]
    $region37: #{tpu_custom_call.1} parent=1 // pred_fallthru
      _
    // Predicated region
    $region38: #{tpu_custom_call.1} parent=1 // pred_check
      _
    $region39: #{tpu_custom_call.1} parent=1 // pred_check_branch
      %380 = sbr.rel (0) target = $region41
    $region40: #{tpu_custom_call.1} parent=1 // pred_region
      %381 = dma.done [#allocation5], 128
    $region41: #{tpu_custom_call.1} parent=1 // pred_fallthru
      _
    %382 = vsyncpa [#allocation4], 1
    %383 = vsyncpa [#allocation7], 1
    %384 = vsyncpa [#allocation5], 1

</llo_original>
